<compile_context>
chip_gen: v5e
topology: v5e:2x2
jax: 0.10.0
libtpu: 0.0.40
codegen_flags: <defaults>
</compile_context>

<pallas_src>
import jax
import jax.numpy as jnp
from jax.experimental import pallas as pl
from jax.experimental.pallas import tpu as pltpu


def _round_up(x, m):
    return ((x + m - 1) // m) * m


def _pick_tile_co(cout):
    # Prefer the largest channel tile that still leaves >= 2 grid blocks
    # (v7x has 2 TensorCores); otherwise the largest divisor; otherwise Cout.
    for c in (256, 128, 64, 32, 16, 8):
        if cout % c == 0 and cout // c >= 2:
            return c
    for c in (256, 128, 64, 32, 16, 8):
        if cout % c == 0:
            return c
    return cout


# ---------------- pass 1: conv matmul tile + per-channel sum / sumsq --------
def conv_stats_kernel(w_ref, x_ref, conv_ref, sum_ref, sq_ref, sum_sc, sq_sc):
    # w_ref:    (tile_co, Kp)      im2col conv weights (Kp = 9*Cin padded to x8)
    # x_ref:    (Kp, tile_m)       im2col patches tile, pixel axis lane-dense
    # conv_ref: (tile_co, tile_m)  raw (pre-BN) conv output tile, lane-dense
    # sum_ref / sq_ref: (tile_co, 1) per-channel sum / sum-of-squares over M
    m_idx = pl.program_id(1)

    @pl.when(m_idx == 0)
    def _():
        sum_sc[...] = jnp.zeros_like(sum_sc)
        sq_sc[...] = jnp.zeros_like(sq_sc)

    acc = jnp.dot(w_ref[...], x_ref[...], preferred_element_type=jnp.float32)
    conv_ref[...] = acc
    # Lane-axis reductions go to the XLU; off the MXU/VPU critical path.
    sum_sc[...] += jnp.sum(acc, axis=-1, keepdims=True)
    sq_sc[...] += jnp.sum(acc * acc, axis=-1, keepdims=True)

    @pl.when(m_idx == pl.num_programs(1) - 1)
    def _():
        sum_ref[...] = sum_sc[...]
        sq_ref[...] = sq_sc[...]


# ---------------- pass 2: apply folded BN scale/shift + ReLU ----------------
def bn_relu_kernel(x_ref, scale_ref, shift_ref, o_ref):
    o_ref[...] = jnp.maximum(
        x_ref[...] * scale_ref[...] + shift_ref[...], 0.0).astype(o_ref.dtype)


def conv_block_forward(x_nchw, weight_oihw, gamma, beta, *,
                       matmul_dtype=jnp.float32, tile_m_target=512):
    """ConvBlock forward. x_nchw: (N, Cin, H, W); weight_oihw: (Cout, Cin, 3, 3).

    matmul_dtype: dtype of the MXU operands only (weights / im2col patches).
    Use jnp.bfloat16 on v6e / v7x; accumulation and BN/ReLU math stay f32.
    """
    N, Cin, H, W = x_nchw.shape
    Cout = weight_oihw.shape[0]
    K = 9 * Cin
    M = N * H * W

    # ---- layout plumbing in XLA (outside the kernels) ----------------------
    # im2col built directly in (K, M) order: k = (dy*3+dx)*Cin + cin matches
    # the weight reshape (Cout, Cin, 3, 3) -> (Cout, 3, 3, Cin) -> (Cout, K).
    x_cnhw = jnp.transpose(x_nchw, (1, 0, 2, 3)).astype(jnp.float32)   # (Cin,N,H,W)
    x_pad = jnp.pad(x_cnhw, ((0, 0), (0, 0), (1, 1), (1, 1)))          # padding=1
    taps = [x_pad[:, :, dy:dy + H, dx:dx + W]
            for dy in range(3) for dx in range(3)]                     # 9 x (Cin,N,H,W)
    patches = jnp.stack(taps, axis=0).reshape(K, M)                    # (K, M)
    w2d = jnp.transpose(weight_oihw, (0, 2, 3, 1)).reshape(Cout, K)    # (Cout, K)

    # K sits on sublanes of the patches block: pad to a multiple of 8.
    Kp = _round_up(K, 8)
    # M tile: multiple of 128 (lane-dense stores), 512-lane target.  Padded
    # zero columns contribute 0 to sum/sumsq, so BN stats stay exact (we divide
    # by the true M below) and the padded outputs are sliced off at the end.
    M128 = _round_up(M, 128)
    tile_m = min(tile_m_target, M128)
    Mp = _round_up(M, tile_m)

    patches = jnp.pad(patches, ((0, Kp - K), (0, Mp - M))).astype(matmul_dtype)
    w2d = jnp.pad(w2d, ((0, 0), (0, Kp - K))).astype(matmul_dtype)

    tile_co = _pick_tile_co(Cout)
    n_co = Cout // tile_co
    n_m = Mp // tile_m

    # ---- VMEM budget (double-buffered pipeline buffers) + headroom ---------
    itm = jnp.dtype(matmul_dtype).itemsize
    buf_a = (2 * tile_co * Kp * itm          # weight tile
             + 2 * Kp * tile_m * itm         # patches tile
             + 2 * tile_co * tile_m * 4      # raw conv output tile
             + 8 * tile_co * 4)              # stat outputs + scratch
    buf_b = (4 * tile_co * tile_m * 4        # conv-in + out tiles
             + 8 * tile_co * 4)              # scale / shift
    vmem_a = int(min(max(2 * buf_a, 32 << 20), 64 << 20))
    vmem_b = int(min(max(2 * buf_b, 32 << 20), 64 << 20))

    # ---- pass 1: conv matmul tiles + per-channel sum / sumsq ---------------
    conv_raw, ch_sum, ch_sq = pl.pallas_call(
        conv_stats_kernel,
        out_shape=(jax.ShapeDtypeStruct((Cout, Mp), jnp.float32),
                   jax.ShapeDtypeStruct((Cout, 1), jnp.float32),
                   jax.ShapeDtypeStruct((Cout, 1), jnp.float32)),
        grid=(n_co, n_m),
        in_specs=[
            pl.BlockSpec((tile_co, Kp), lambda co, m: (co, 0)),    # weights
            pl.BlockSpec((Kp, tile_m), lambda co, m: (0, m)),      # patches
        ],
        out_specs=[
            pl.BlockSpec((tile_co, tile_m), lambda co, m: (co, m)),
            pl.BlockSpec((tile_co, 1), lambda co, m: (co, 0)),     # resident over m
            pl.BlockSpec((tile_co, 1), lambda co, m: (co, 0)),
        ],
        scratch_shapes=[pltpu.VMEM((tile_co, 1), jnp.float32),
                        pltpu.VMEM((tile_co, 1), jnp.float32)],
        compiler_params=pltpu.CompilerParams(
            dimension_semantics=("parallel", "arbitrary"),
            vmem_limit_bytes=vmem_a),
    )(w2d, patches)

    # ---- fold BN (training mode, biased variance, eps=1e-5) ----------------
    inv_m = 1.0 / M                                      # true pixel count
    mean = ch_sum * inv_m                                # (Cout, 1)
    var = jnp.maximum(ch_sq * inv_m - mean * mean, 0.0)
    scale = gamma.reshape(Cout, 1).astype(jnp.float32) * jax.lax.rsqrt(var + 1e-5)
    shift = beta.reshape(Cout, 1).astype(jnp.float32) - mean * scale

    # ---- pass 2: y = max(conv*scale + shift, 0), fully parallel tiles ------
    out2d = pl.pallas_call(
        bn_relu_kernel,
        out_shape=jax.ShapeDtypeStruct((Cout, Mp), jnp.float32),
        grid=(n_co, n_m),
        in_specs=[
            pl.BlockSpec((tile_co, tile_m), lambda co, m: (co, m)),
            pl.BlockSpec((tile_co, 1), lambda co, m: (co, 0)),
            pl.BlockSpec((tile_co, 1), lambda co, m: (co, 0)),
        ],
        out_specs=pl.BlockSpec((tile_co, tile_m), lambda co, m: (co, m)),
        compiler_params=pltpu.CompilerParams(
            dimension_semantics=("parallel", "parallel"),
            vmem_limit_bytes=vmem_b),
    )(conv_raw, scale, shift)

    # (Cout, N*H*W) -> (N, Cout, H, W)
    out2d = out2d[:, :M]
    return jnp.transpose(out2d.reshape(Cout, N, H, W), (1, 0, 2, 3))


def reference_forward(x_nchw, weight_oihw, gamma, beta):
    """Pure-JAX reference matching PyTorch ConvBlock (training-mode BN)."""
    y = jax.lax.conv_general_dilated(
        x_nchw, weight_oihw, window_strides=(1, 1), padding=((1, 1), (1, 1)),
        dimension_numbers=("NCHW", "OIHW", "NCHW"))
    mean = jnp.mean(y, axis=(0, 2, 3), keepdims=True)
    var = jnp.mean(jnp.square(y - mean), axis=(0, 2, 3), keepdims=True)
    yn = (y - mean) * jax.lax.rsqrt(var + 1e-5)
    yn = yn * gamma.reshape(1, -1, 1, 1) + beta.reshape(1, -1, 1, 1)
    return jnp.maximum(yn, 0.0)


if __name__ == "__main__":
    key = jax.random.PRNGKey(0)
    kx, kw = jax.random.split(key)

    N, Cin, Cout, H, W = 2, 4, 8, 16, 16
    x = jax.random.normal(kx, (N, Cin, H, W), jnp.float32)

    # Deterministic parameter init (shapes from ConvBlock.__init__):
    # conv weight (Cout, Cin, 3, 3), kaiming-like scale; BN gamma=1, beta=0.
    fan_in = Cin * 3 * 3
    weight = jax.random.normal(kw, (Cout, Cin, 3, 3), jnp.float32) * (2.0 / fan_in) ** 0.5
    gamma = jnp.ones((Cout,), jnp.float32)
    beta = jnp.zeros((Cout,), jnp.float32)

    ref = reference_forward(x, weight, gamma, beta)

    # f32 MXU operands, single M tile (M = 512).
    out = jax.block_until_ready(conv_block_forward(x, weight, gamma, beta))
    assert out.shape == (N, Cout, H, W), out.shape
    assert jnp.allclose(out, ref, atol=1e-3, rtol=1e-3), float(jnp.max(jnp.abs(out - ref)))

    # f32, M tiled into 2 blocks: exercises the two-pass BN accumulation path.
    out_t = jax.block_until_ready(
        conv_block_forward(x, weight, gamma, beta, tile_m_target=256))
    assert jnp.allclose(out_t, ref, atol=1e-3, rtol=1e-3), float(jnp.max(jnp.abs(out_t - ref)))

    # bf16 MXU operands (recommended on v6e / v7x); accumulation stays f32,
    # only the conv inputs are rounded -> loose tolerance.
    out_bf16 = jax.block_until_ready(
        conv_block_forward(x, weight, gamma, beta, matmul_dtype=jnp.bfloat16))
    assert float(jnp.max(jnp.abs(out_bf16 - ref))) < 0.1

    print("KERNEL_OK")
</pallas_src>

<mosaic_0001>
module attributes {stable_mosaic.version = 11 : i64} {
  func.func @conv_stats_kernel(%arg0: i32, %arg1: i32, %arg2: memref<8x40xf32, #tpu.memory_space<vmem>>, %arg3: memref<40x512xf32, #tpu.memory_space<vmem>>, %arg4: memref<8x512xf32, #tpu.memory_space<vmem>>, %arg5: memref<8x1xf32, #tpu.memory_space<vmem>>, %arg6: memref<8x1xf32, #tpu.memory_space<vmem>>, %arg7: memref<8x1xf32, #tpu.memory_space<vmem>>, %arg8: memref<8x1xf32, #tpu.memory_space<vmem>>) attributes {dimension_semantics = [#tpu.dimension_semantics<parallel>, #tpu.dimension_semantics<arbitrary>], iteration_bounds = array<i64: 1, 1>, scalar_prefetch = 0 : i64, scratch_operands = 2 : i64, tpu.core_type = #tpu.core_type<tc>, window_params = [{transform_indices = @transform_0, window_bounds = array<i64: 8, 40>}, {transform_indices = @transform_1, window_bounds = array<i64: 40, 512>}, {transform_indices = @transform_2, window_bounds = array<i64: 8, 512>}, {transform_indices = @transform_3, window_bounds = array<i64: 8, 1>}, {transform_indices = @transform_4, window_bounds = array<i64: 8, 1>}]} {
    %c0_i32 = arith.constant 0 : i32
    %0 = arith.cmpi eq, %arg1, %c0_i32 : i32
    %1 = arith.extui %0 : i1 to i32
    %c0_i32_0 = arith.constant 0 : i32
    %2 = arith.cmpi ne, %1, %c0_i32_0 : i32
    scf.if %2 {
      %cst_18 = arith.constant 0.000000e+00 : f32
      %21 = vector.broadcast %cst_18 : f32 to vector<8x1xf32>
      %c0_19 = arith.constant 0 : index
      %c0_20 = arith.constant 0 : index
      %22 = vector.load %arg7[%c0_19, %c0_20] : memref<8x1xf32, #tpu.memory_space<vmem>>, vector<8x1xf32>
      tpu.vector_store %arg7[%c0_19, %c0_20], %21 {strides = array<i32>} : memref<8x1xf32, #tpu.memory_space<vmem>>, vector<8x1xf32>,
      %cst_21 = arith.constant 0.000000e+00 : f32
      %23 = vector.broadcast %cst_21 : f32 to vector<8x1xf32>
      %c0_22 = arith.constant 0 : index
      %c0_23 = arith.constant 0 : index
      %24 = vector.load %arg8[%c0_22, %c0_23] : memref<8x1xf32, #tpu.memory_space<vmem>>, vector<8x1xf32>
      tpu.vector_store %arg8[%c0_22, %c0_23], %23 {strides = array<i32>} : memref<8x1xf32, #tpu.memory_space<vmem>>, vector<8x1xf32>,
    } else {
    }
    %c0 = arith.constant 0 : index
    %c0_1 = arith.constant 0 : index
    %3 = vector.load %arg2[%c0, %c0_1] : memref<8x40xf32, #tpu.memory_space<vmem>>, vector<8x40xf32>
    %c0_2 = arith.constant 0 : index
    %c0_3 = arith.constant 0 : index
    %4 = vector.load %arg3[%c0_2, %c0_3] : memref<40x512xf32, #tpu.memory_space<vmem>>, vector<40x512xf32>
    %cst = arith.constant dense<0.000000e+00> : vector<8x512xf32>
    %5 = tpu.matmul %3, %4, %cst {dimension_numbers = #tpu.dot_dimension_numbers<[1], [0], [0], [1], [0, 0, 1, 1], [], []>} : vector<8x40xf32>, vector<40x512xf32>, vector<8x512xf32> -> vector<8x512xf32>
    %c0_4 = arith.constant 0 : index
    %c0_5 = arith.constant 0 : index
    %6 = vector.load %arg4[%c0_4, %c0_5] : memref<8x512xf32, #tpu.memory_space<vmem>>, vector<8x512xf32>
    tpu.vector_store %arg4[%c0_4, %c0_5], %5 {strides = array<i32>} : memref<8x512xf32, #tpu.memory_space<vmem>>, vector<8x512xf32>,
    %c0_6 = arith.constant 0 : index
    %c0_7 = arith.constant 0 : index
    %7 = vector.load %arg7[%c0_6, %c0_7] : memref<8x1xf32, #tpu.memory_space<vmem>>, vector<8x1xf32>
    %cst_8 = arith.constant dense<0.000000e+00> : vector<8xf32>
    %8 = vector.multi_reduction <add>, %5, %cst_8 [1] : vector<8x512xf32> to vector<8xf32>
    %9 = vector.shape_cast %8 : vector<8xf32> to vector<8x1xf32>
    %10 = arith.addf %7, %9 : vector<8x1xf32>
    %c0_9 = arith.constant 0 : index
    %c0_10 = arith.constant 0 : index
    %11 = vector.load %arg7[%c0_9, %c0_10] : memref<8x1xf32, #tpu.memory_space<vmem>>, vector<8x1xf32>
    tpu.vector_store %arg7[%c0_9, %c0_10], %10 {strides = array<i32>} : memref<8x1xf32, #tpu.memory_space<vmem>>, vector<8x1xf32>,
    %c0_11 = arith.constant 0 : index
    %c0_12 = arith.constant 0 : index
    %12 = vector.load %arg8[%c0_11, %c0_12] : memref<8x1xf32, #tpu.memory_space<vmem>>, vector<8x1xf32>
    %13 = arith.mulf %5, %5 : vector<8x512xf32>
    %cst_13 = arith.constant dense<0.000000e+00> : vector<8xf32>
    %14 = vector.multi_reduction <add>, %13, %cst_13 [1] : vector<8x512xf32> to vector<8xf32>
    %15 = vector.shape_cast %14 : vector<8xf32> to vector<8x1xf32>
    %16 = arith.addf %12, %15 : vector<8x1xf32>
    %c0_14 = arith.constant 0 : index
    %c0_15 = arith.constant 0 : index
    %17 = vector.load %arg8[%c0_14, %c0_15] : memref<8x1xf32, #tpu.memory_space<vmem>>, vector<8x1xf32>
    tpu.vector_store %arg8[%c0_14, %c0_15], %16 {strides = array<i32>} : memref<8x1xf32, #tpu.memory_space<vmem>>, vector<8x1xf32>,
    %c0_i32_16 = arith.constant 0 : i32
    %18 = arith.cmpi eq, %arg1, %c0_i32_16 : i32
    %19 = arith.extui %18 : i1 to i32
    %c0_i32_17 = arith.constant 0 : i32
    %20 = arith.cmpi ne, %19, %c0_i32_17 : i32
    scf.if %20 {
      %c0_18 = arith.constant 0 : index
      %c0_19 = arith.constant 0 : index
      %21 = vector.load %arg7[%c0_18, %c0_19] : memref<8x1xf32, #tpu.memory_space<vmem>>, vector<8x1xf32>
      %c0_20 = arith.constant 0 : index
      %c0_21 = arith.constant 0 : index
      %22 = vector.load %arg5[%c0_20, %c0_21] : memref<8x1xf32, #tpu.memory_space<vmem>>, vector<8x1xf32>
      tpu.vector_store %arg5[%c0_20, %c0_21], %21 {strides = array<i32>} : memref<8x1xf32, #tpu.memory_space<vmem>>, vector<8x1xf32>,
      %c0_22 = arith.constant 0 : index
      %c0_23 = arith.constant 0 : index
      %23 = vector.load %arg8[%c0_22, %c0_23] : memref<8x1xf32, #tpu.memory_space<vmem>>, vector<8x1xf32>
      %c0_24 = arith.constant 0 : index
      %c0_25 = arith.constant 0 : index
      %24 = vector.load %arg6[%c0_24, %c0_25] : memref<8x1xf32, #tpu.memory_space<vmem>>, vector<8x1xf32>
      tpu.vector_store %arg6[%c0_24, %c0_25], %23 {strides = array<i32>} : memref<8x1xf32, #tpu.memory_space<vmem>>, vector<8x1xf32>,
    } else {
    }
    return
  }
  func.func @transform_0(%arg0: i32, %arg1: i32) -> (i32, i32) {
    %c0_i32 = arith.constant 0 : i32
    %c0_i32_0 = arith.constant 0 : i32
    return %arg0, %c0_i32 : i32, i32
  }
  func.func @transform_1(%arg0: i32, %arg1: i32) -> (i32, i32) {
    %c0_i32 = arith.constant 0 : i32
    %c0_i32_0 = arith.constant 0 : i32
    return %c0_i32, %arg1 : i32, i32
  }
  func.func @transform_2(%arg0: i32, %arg1: i32) -> (i32, i32) {
    %c0_i32 = arith.constant 0 : i32
    return %arg0, %arg1 : i32, i32
  }
  func.func @transform_3(%arg0: i32, %arg1: i32) -> (i32, i32) {
    %c0_i32 = arith.constant 0 : i32
    %c0_i32_0 = arith.constant 0 : i32
    return %arg0, %c0_i32 : i32, i32
  }
  func.func @transform_4(%arg0: i32, %arg1: i32) -> (i32, i32) {
    %c0_i32 = arith.constant 0 : i32
    %c0_i32_0 = arith.constant 0 : i32
    return %arg0, %c0_i32 : i32, i32
  }
}

</mosaic_0001>

<llo_original>
// kernel: tpu_custom_call.1
$region0: #{tpu_custom_call.1}
  #allocation0 [shape = 'u32[]', space=smem, size = 0x4, offset = 0x4, fixed_abs, tag = 'smem constant byte address 0x4 - core index']
  #allocation1 [shape = 'u32[72,128]{1,0:T(1,128)}', space=vmem, size = 0x9000, scoped, tag = 'internal scratch']
  #allocation2 [shape = 'f32[8,1]{1,0:T(8,128)}', space=vmem, size = 0x1000, scoped, tag = 'scratch operand']
  #allocation3 [shape = 'f32[8,1]{1,0:T(8,128)}', space=vmem, size = 0x1000, scoped, tag = 'scratch operand']
  %s0 = inlined_call_operand.hbm [shape: f32[8,40], index: 0, kind: input, shape index: {}]
  %s1 = inlined_call_operand.hbm [shape: f32[40,512], index: 1, kind: input, shape index: {}]
  %s2 = inlined_call_operand.hbm [shape: f32[8,512], index: 2, kind: output, shape index: {0}]
  %s3 = inlined_call_operand.vmem [shape: f32[8,1], index: 3, kind: output, shape index: {1}]
  %s4 = inlined_call_operand.vmem [shape: f32[8,1], index: 4, kind: output, shape index: {2}]
  %5 = xla_tuple %s2, %s3, %s4
  %s6 = sld [smem:[#allocation0]]
  $region50: #{tpu_custom_call.1} parent=0
    _
  %s8 = ssub.s32 1, %s6
  %s9 = scalar_select 0, %s8, %s6
  $region1: #{tpu_custom_call.1} parent=0
    #allocation4 [shape = 'u8[4096]{0}', space=vmem, size = 0x1000, scoped, tag = 'input window, operand 0, single buffered']
    #allocation5 [shape = 's32[1]{0}', space=sflag, size = 0x4, scoped, tag = 'scoped memory for tpu_custom_call.1']
    #allocation6 [shape = 's32[1]{0}', space=sflag, size = 0x4, scoped, tag = 'scoped memory for tpu_custom_call.1']
    #allocation7 [shape = 'u8[81920]{0}', space=vmem, size = 0x14000, scoped, tag = 'input window, operand 1, single buffered']
    #allocation8 [shape = 's32[1]{0}', space=sflag, size = 0x4, scoped, tag = 'scoped memory for tpu_custom_call.1']
    #allocation9 [shape = 'u8[16384]{0}', space=vmem, size = 0x4000, scoped, tag = 'output window, operand 0, single buffered']
    %10 = vsyncpa [#allocation5], 0
    %11 = vsyncpa [#allocation8], 0
    %12 = vsyncpa [#allocation6], 0
    // Predicated region
    $region2: #{tpu_custom_call.1} parent=1 // pred_check
      _
    $region3: #{tpu_custom_call.1} parent=1 // pred_check_branch
      %14 = sbr.rel (0) target = $region5
    $region4: #{tpu_custom_call.1} parent=1 // pred_region
      %16 = vsyncadd [#allocation5], 0
      %s18 = sshll.u32 %s0, 4
      %s19 = int_to_ptr.hbm [resolvable:$true] %s18
      %s20 = sshll.u32 [#allocation4], 4
      %s21 = int_to_ptr.vmem [resolvable:$true] %s20
      %23 = dma.hbm_to_vmem [thread:$0]  %s19, 128, %s21, [#allocation5]
    $region5: #{tpu_custom_call.1} parent=1 // pred_fallthru
      _
    // Predicated region
    $region6: #{tpu_custom_call.1} parent=1 // pred_check
      _
    $region7: #{tpu_custom_call.1} parent=1 // pred_check_branch
      %25 = sbr.rel (0) target = $region9
    $region8: #{tpu_custom_call.1} parent=1 // pred_region
      %27 = vsyncadd [#allocation8], 0
      %s28 = sshll.u32 %s1, 4
      %s29 = int_to_ptr.hbm [resolvable:$true] %s28
      %s30 = sshll.u32 [#allocation7], 4
      %s31 = int_to_ptr.vmem [resolvable:$true] %s30
      %36 = dma.hbm_to_vmem [thread:$0]  %s29, 2560, %s31, [#allocation8], 512, 512, 32
    $region9: #{tpu_custom_call.1} parent=1 // pred_fallthru
      _
    // Predicated region
    $region10: #{tpu_custom_call.1} parent=1 // pred_check
      _
    $region11: #{tpu_custom_call.1} parent=1 // pred_check_branch
      %38 = sbr.rel (0) target = $region13
    $region12: #{tpu_custom_call.1} parent=1 // pred_region
      %40 = dma.done [#allocation5], 128
    $region13: #{tpu_custom_call.1} parent=1 // pred_fallthru
      _
    // Predicated region
    $region14: #{tpu_custom_call.1} parent=1 // pred_check
      _
    $region15: #{tpu_custom_call.1} parent=1 // pred_check_branch
      %42 = sbr.rel (0) target = $region17
    $region16: #{tpu_custom_call.1} parent=1 // pred_region
      %44 = dma.done [#allocation8], 2560
    $region17: #{tpu_custom_call.1} parent=1 // pred_fallthru
      _
    %p45 = scmp.eq.s32.totalorder 0, 0
    // Predicated region
    $region18: #{tpu_custom_call.1} parent=1 // pred_check
      %p46 = pneg %p45
    $region19: #{tpu_custom_call.1} parent=1 // pred_check_branch
      %48 = sbr.rel (%p46) target = $region21
    $region20: #{tpu_custom_call.1} parent=1 // pred_region
      %vm49 = vcmask 7168
      %50 = vst.msk [vmem:[#allocation2] sm:$0xff] %vm49, 0.0
      %51 = vst.msk [vmem:[#allocation3] sm:$0xff] %vm49, 0.0
    $region21: #{tpu_custom_call.1} parent=1 // pred_fallthru
      _
    %v52 = vld [vmem:[#allocation4] sm:$0xff]
    %v53 = vld [vmem:[#allocation7] sm:$0xff]
    %v54 = vld [vmem:[#allocation7 + $0x8] sm:$0xff]
    %v55 = vld [vmem:[#allocation7 + $0x10] sm:$0xff]
    %v56 = vld [vmem:[#allocation7 + $0x18] sm:$0xff]
    %v57 = vld [vmem:[#allocation7 + $0x20] sm:$0xff]
    %v58 = vld [vmem:[#allocation7 + $0x28] sm:$0xff]
    %v59 = vld [vmem:[#allocation7 + $0x30] sm:$0xff]
    %v60 = vld [vmem:[#allocation7 + $0x38] sm:$0xff]
    %v61 = vld [vmem:[#allocation7 + $0x40] sm:$0xff]
    %v62 = vld [vmem:[#allocation7 + $0x48] sm:$0xff]
    %v63 = vld [vmem:[#allocation7 + $0x50] sm:$0xff]
    %v64 = vld [vmem:[#allocation7 + $0x58] sm:$0xff]
    %v65 = vld [vmem:[#allocation7 + $0x60] sm:$0xff]
    %v66 = vld [vmem:[#allocation7 + $0x68] sm:$0xff]
    %v67 = vld [vmem:[#allocation7 + $0x70] sm:$0xff]
    %v68 = vld [vmem:[#allocation7 + $0x78] sm:$0xff]
    %v69 = vld [vmem:[#allocation7 + $0x80] sm:$0xff]
    %v70 = vld [vmem:[#allocation7 + $0x88] sm:$0xff]
    %v71 = vld [vmem:[#allocation7 + $0x90] sm:$0xff]
    %v72 = vld [vmem:[#allocation7 + $0x98] sm:$0xff]
    %vm73 = vcmask 326656
    %v75 = vsel %vm73, %v52, 0
    %77 = vmatpush.msra.mxu0 0.0
    %78 = vmatpush.msra.mxu0 0.0
    %79 = vmatpush.msra.mxu0 0.0
    %80 = vmatpush.msra.mxu0 0.0
    %81 = vmatpush.msra.mxu0 0.0
    %82 = vmatpush.msra.mxu0 0.0
    %83 = vmatpush.msra.mxu0 0.0
    %84 = vmatpush.msra.mxu0 0.0
    %85 = vmatpush.msra.mxu0 0.0
    %86 = vmatpush.msra.mxu0 0.0
    %87 = vmatpush.msra.mxu0 0.0
    %88 = vmatpush.msra.mxu0 %v69
    %89 = vmatpush.msra.mxu0 %v65
    %90 = vmatpush.msra.mxu0 %v61
    %91 = vmatpush.msra.mxu0 %v57
    %92 = vmatpush.msra.mxu0 %v53
    %93 = vmatmul.f32.gmra.mxu0 %v75
    %v94 = vpop.f32.mrf.mxu0
    %v95 = vadd.f32 0.0, %v94
    %96 = vdwg.mxu0
    %97 = vmatpush.msra.mxu0 0.0
    %98 = vmatpush.msra.mxu0 0.0
    %99 = vmatpush.msra.mxu0 0.0
    %100 = vmatpush.msra.mxu0 0.0
    %101 = vmatpush.msra.mxu0 0.0
    %102 = vmatpush.msra.mxu0 0.0
    %103 = vmatpush.msra.mxu0 0.0
    %104 = vmatpush.msra.mxu0 0.0
    %105 = vmatpush.msra.mxu0 0.0
    %106 = vmatpush.msra.mxu0 0.0
    %107 = vmatpush.msra.mxu0 0.0
    %108 = vmatpush.msra.mxu0 %v70
    %109 = vmatpush.msra.mxu0 %v66
    %110 = vmatpush.msra.mxu0 %v62
    %111 = vmatpush.msra.mxu0 %v58
    %112 = vmatpush.msra.mxu0 %v54
    %113 = vmatmul.f32.gmra.mxu0 %v75
    %v114 = vpop.f32.mrf.mxu0
    %v115 = vadd.f32 0.0, %v114
    %116 = vdwg.mxu0
    %117 = vmatpush.msra.mxu0 0.0
    %118 = vmatpush.msra.mxu0 0.0
    %119 = vmatpush.msra.mxu0 0.0
    %120 = vmatpush.msra.mxu0 0.0
    %121 = vmatpush.msra.mxu0 0.0
    %122 = vmatpush.msra.mxu0 0.0
    %123 = vmatpush.msra.mxu0 0.0
    %124 = vmatpush.msra.mxu0 0.0
    %125 = vmatpush.msra.mxu0 0.0
    %126 = vmatpush.msra.mxu0 0.0
    %127 = vmatpush.msra.mxu0 0.0
    %128 = vmatpush.msra.mxu0 %v71
    %129 = vmatpush.msra.mxu0 %v67
    %130 = vmatpush.msra.mxu0 %v63
    %131 = vmatpush.msra.mxu0 %v59
    %132 = vmatpush.msra.mxu0 %v55
    %133 = vmatmul.f32.gmra.mxu0 %v75
    %v134 = vpop.f32.mrf.mxu0
    %v135 = vadd.f32 0.0, %v134
    %136 = vdwg.mxu0
    %137 = vmatpush.msra.mxu0 0.0
    %138 = vmatpush.msra.mxu0 0.0
    %139 = vmatpush.msra.mxu0 0.0
    %140 = vmatpush.msra.mxu0 0.0
    %141 = vmatpush.msra.mxu0 0.0
    %142 = vmatpush.msra.mxu0 0.0
    %143 = vmatpush.msra.mxu0 0.0
    %144 = vmatpush.msra.mxu0 0.0
    %145 = vmatpush.msra.mxu0 0.0
    %146 = vmatpush.msra.mxu0 0.0
    %147 = vmatpush.msra.mxu0 0.0
    %148 = vmatpush.msra.mxu0 %v72
    %149 = vmatpush.msra.mxu0 %v68
    %150 = vmatpush.msra.mxu0 %v64
    %151 = vmatpush.msra.mxu0 %v60
    %152 = vmatpush.msra.mxu0 %v56
    %153 = vmatmul.f32.gmra.mxu0 %v75
    %v154 = vpop.f32.mrf.mxu0
    %v155 = vadd.f32 0.0, %v154
    %156 = vdwg.mxu0
    %157 = vst [vmem:[#allocation9] sm:$0xff] %v95
    %158 = vst [vmem:[#allocation9 + $0x8] sm:$0xff] %v115
    %159 = vst [vmem:[#allocation9 + $0x10] sm:$0xff] %v135
    %160 = vst [vmem:[#allocation9 + $0x18] sm:$0xff] %v155
    %v161 = vld [vmem:[#allocation2] sm:$0xff]
    %v162 = vadd.f32 %v95, %v115
    %v163 = vadd.f32 %v162, %v135
    %v164 = vadd.f32 %v163, %v155
    %165 = vadd.xlane.f32.xlu0 %v164
    %v166 = vpop.xlane.xlu0 %165
    %v167 = vadd.f32 %v161, %v166
    %vm168 = vcmask 7168
    %169 = vst.msk [vmem:[#allocation2] sm:$0xff] %vm168, %v167
    %v170 = vld [vmem:[#allocation3] sm:$0xff]
    %v171 = vmul.f32 %v95, %v95
    %v172 = vmul.f32 %v115, %v115
    %v173 = vmul.f32 %v135, %v135
    %v174 = vmul.f32 %v155, %v155
    %v175 = vadd.f32 %v171, %v172
    %v176 = vadd.f32 %v175, %v173
    %v177 = vadd.f32 %v176, %v174
    %178 = vadd.xlane.f32.xlu0 %v177
    %v179 = vpop.xlane.xlu0 %178
    %v180 = vadd.f32 %v170, %v179
    %181 = vst.msk [vmem:[#allocation3] sm:$0xff] %vm168, %v180
    // Predicated region
    $region22: #{tpu_custom_call.1} parent=1 // pred_check
      %p182 = pneg %p45
    $region23: #{tpu_custom_call.1} parent=1 // pred_check_branch
      %184 = sbr.rel (%p182) target = $region25
    $region24: #{tpu_custom_call.1} parent=1 // pred_region
      %v185 = vld [vmem:[#allocation2] sm:$0xff]
      %186 = vst.msk [vmem:[%s3] sm:$0xff] %vm168, %v185
      %v187 = vld [vmem:[#allocation3] sm:$0xff]
      %188 = vst.msk [vmem:[%s4] sm:$0xff] %vm168, %v187
    $region25: #{tpu_custom_call.1} parent=1 // pred_fallthru
      _
    // Predicated region
    $region26: #{tpu_custom_call.1} parent=1 // pred_check
      _
    $region27: #{tpu_custom_call.1} parent=1 // pred_check_branch
      %190 = sbr.rel (0) target = $region29
    $region28: #{tpu_custom_call.1} parent=1 // pred_region
      %192 = vsyncadd [#allocation6], 0
      %s194 = sshll.u32 [#allocation9], 4
      %s195 = int_to_ptr.vmem [resolvable:$true] %s194
      %s196 = sshll.u32 %s2, 4
      %s197 = int_to_ptr.hbm [resolvable:$true] %s196
      %199 = dma.vmem_to_hbm [thread:$0]  %s195, 512, %s197, [#allocation6]
    $region29: #{tpu_custom_call.1} parent=1 // pred_fallthru
      _
    // Predicated region
    $region30: #{tpu_custom_call.1} parent=1 // pred_check
      _
    $region31: #{tpu_custom_call.1} parent=1 // pred_check_branch
      %201 = sbr.rel (0) target = $region33
    $region32: #{tpu_custom_call.1} parent=1 // pred_region
      _
    $region33: #{tpu_custom_call.1} parent=1 // pred_fallthru
      _
    // Predicated region
    $region34: #{tpu_custom_call.1} parent=1 // pred_check
      _
    $region35: #{tpu_custom_call.1} parent=1 // pred_check_branch
      %203 = sbr.rel (0) target = $region37
    $region36: #{tpu_custom_call.1} parent=1 // pred_region
      _
    $region37: #{tpu_custom_call.1} parent=1 // pred_fallthru
      _
    // Predicated region
    $region38: #{tpu_custom_call.1} parent=1 // pred_check
      _
    $region39: #{tpu_custom_call.1} parent=1 // pred_check_branch
      %205 = sbr.rel (0) target = $region41
    $region40: #{tpu_custom_call.1} parent=1 // pred_region
      %207 = dma.done [#allocation6], 512
    $region41: #{tpu_custom_call.1} parent=1 // pred_fallthru
      _
    // Predicated region
    $region42: #{tpu_custom_call.1} parent=1 // pred_check
      _
    $region43: #{tpu_custom_call.1} parent=1 // pred_check_branch
      %209 = sbr.rel (0) target = $region45
    $region44: #{tpu_custom_call.1} parent=1 // pred_region
      _
    $region45: #{tpu_custom_call.1} parent=1 // pred_fallthru
      _
    // Predicated region
    $region46: #{tpu_custom_call.1} parent=1 // pred_check
      _
    $region47: #{tpu_custom_call.1} parent=1 // pred_check_branch
      %211 = sbr.rel (0) target = $region49
    $region48: #{tpu_custom_call.1} parent=1 // pred_region
      _
    $region49: #{tpu_custom_call.1} parent=1 // pred_fallthru
      _
    %212 = vsyncpa [#allocation5], 1
    %213 = vsyncpa [#allocation8], 1
    %214 = vsyncpa [#allocation6], 1

</llo_original>
